<compile_context>
chip_gen: v7x
topology: tpu7x:2x2x1
jax: 0.10.0
libtpu: 0.0.40
codegen_flags: <defaults>
</compile_context>

<pallas_src>
import jax
import jax.numpy as jnp
from jax.experimental import pallas as pl
from jax.experimental.pallas import tpu as pltpu


def _make_kernel(h, total_rows, tile_rows):
    """Kernel over a (tile_rows, W) slab of row-stacked images (tile_rows = BT*H)."""

    def kernel(x_ref, part_ref):
        x = x_ref[...].astype(jnp.float32)            # (TR, W)
        tr, w = x.shape
        zero = jnp.float32(0.0)

        r = jax.lax.broadcasted_iota(jnp.int32, (tr, w), 0)
        c = jax.lax.broadcasted_iota(jnp.int32, (tr, w), 1)
        rh = r % h                                    # row index within its image

        # Vertical 3-sum. Rolls wrap around, so mask the wrapped rows; the same
        # mask also zeroes the seam between stacked images (== zero padding).
        up = jnp.where(rh > 0, pltpu.roll(x, 1, axis=0), zero)           # x[i-1]
        down = jnp.where(rh < h - 1, pltpu.roll(x, tr - 1, axis=0), zero)  # x[i+1]
        vert = up + x + down

        # Horizontal 3-sum with zero boundary at left/right image edges.
        left = jnp.where(c > 0, pltpu.roll(vert, 1, axis=1), zero)
        right = jnp.where(c < w - 1, pltpu.roll(vert, w - 1, axis=1), zero)
        box = left + vert + right

        # conv = center - (box - center)/8 = 1.125*x - 0.125*box
        conv = x * jnp.float32(1.125) - box * jnp.float32(0.125)

        # Mask rows past the end of the batch (last partial grid block).
        gr = pl.program_id(0) * tile_rows + r
        val = jnp.where(gr < total_rows, jnp.abs(conv), zero)

        # Per-block partial sums, reduced only along the sublane axis here;
        # the final cross-lane reduction happens once in the wrapper.
        part_ref[...] = jnp.sum(val, axis=0, keepdims=True)

    return kernel


def smooth_loss(x, *, target_tile_bytes=2 * 1024 * 1024):
    """x: [N, 1, H, W] (NCHW, single channel). Returns scalar f32 loss."""
    n, c, h, w = x.shape
    assert c == 1, "SmoothLoss kernel expects single-channel input (C=1)"

    xf = x.reshape(n * h, w)          # contiguous reshape: no HBM copy
    total_rows = n * h

    # Images per grid step: target ~2 MiB input tiles; keep the sublane dim a
    # multiple of 8 unless a single tile covers the whole batch.
    bytes_per_img = h * w * x.dtype.itemsize
    bt = max(1, min(n, target_tile_bytes // max(1, bytes_per_img)))
    while bt < n and (bt * h) % 8 != 0:
        bt += 1
    bt = min(bt, n)
    tile_rows = bt * h
    num_blocks = (n + bt - 1) // bt

    kernel = _make_kernel(h, total_rows, tile_rows)

    partial = pl.pallas_call(
        kernel,
        out_shape=jax.ShapeDtypeStruct((num_blocks, w), jnp.float32),
        grid_spec=pltpu.PrefetchScalarGridSpec(
            num_scalar_prefetch=0,
            grid=(num_blocks,),
            in_specs=[pl.BlockSpec((tile_rows, w), lambda b: (b, 0))],
            out_specs=pl.BlockSpec((1, w), lambda b: (b, 0)),
        ),
        compiler_params=pltpu.CompilerParams(
            dimension_semantics=("parallel",),
        ),
    )(xf)

    return jnp.sum(partial) / jnp.float32(n * c * h * w)


def _reference(x):
    """Plain-JAX reference of the PyTorch forward (for sanity check)."""
    k = jnp.array([[-1., -1., -1.], [-1., 8., -1.], [-1., -1., -1.]],
                  dtype=x.dtype) / 8.0
    out = jax.lax.conv_general_dilated(
        x, k[None, None, :, :], window_strides=(1, 1),
        padding=((1, 1), (1, 1)),
        dimension_numbers=("NCHW", "OIHW", "NCHW"))
    return jnp.mean(jnp.abs(out))


if __name__ == "__main__":
    key = jax.random.PRNGKey(0)
    x = jax.random.normal(key, (2, 1, 16, 16), dtype=jnp.float32)

    loss = smooth_loss(x)
    jax.block_until_ready(loss)

    ref = _reference(x)
    assert jnp.allclose(loss, ref, rtol=1e-5, atol=1e-5), (loss, ref)

    print("KERNEL_OK")
</pallas_src>

<mosaic_0001>
module attributes {stable_mosaic.version = 11 : i64} {
  func.func @kernel(%arg0: i32, %arg1: memref<32x16xf32, #tpu.memory_space<vmem>>, %arg2: memref<1x16xf32, #tpu.memory_space<vmem>>) attributes {dimension_semantics = [#tpu.dimension_semantics<parallel>], iteration_bounds = array<i64: 1>, scalar_prefetch = 0 : i64, scratch_operands = 0 : i64, tpu.core_type = #tpu.core_type<tc>, window_params = [{transform_indices = @transform_0, window_bounds = array<i64: 32, 16>}, {transform_indices = @transform_1, window_bounds = array<i64: 1, 16>}]} {
    %c0 = arith.constant 0 : index
    %c0_0 = arith.constant 0 : index
    %0 = vector.load %arg1[%c0, %c0_0] : memref<32x16xf32, #tpu.memory_space<vmem>>, vector<32x16xf32>
    %1 = tpu.iota {dimensions = array<i32: 0>} : vector<32x16xi32>
    %2 = tpu.iota {dimensions = array<i32: 1>} : vector<32x16xi32>
    %c16_i32 = arith.constant 16 : i32
    %c0_i32 = arith.constant 0 : i32
    %3 = arith.cmpi eq, %c16_i32, %c0_i32 : i32
    %c1_i32 = arith.constant 1 : i32
    %4 = arith.select %3, %c1_i32, %c16_i32 : i32
    %5 = vector.broadcast %4 : i32 to vector<32x16xi32>
    %6 = arith.remsi %1, %5 : vector<32x16xi32>
    %c0_i32_1 = arith.constant 0 : i32
    %7 = vector.broadcast %c0_i32_1 : i32 to vector<32x16xi32>
    %8 = arith.cmpi ne, %6, %7 : vector<32x16xi32>
    %c0_i32_2 = arith.constant 0 : i32
    %9 = vector.broadcast %c0_i32_2 : i32 to vector<32x16xi32>
    %10 = arith.cmpi slt, %6, %9 : vector<32x16xi32>
    %c0_i32_3 = arith.constant 0 : i32
    %11 = arith.cmpi slt, %4, %c0_i32_3 : i32
    %12 = vector.broadcast %11 : i1 to vector<32x16xi1>
    %13 = vector.broadcast %12 : vector<32x16xi1> to vector<32x16xi1>
    %14 = arith.xori %10, %13 : vector<32x16xi1>
    %15 = arith.andi %14, %8 : vector<32x16xi1>
    %16 = vector.broadcast %4 : i32 to vector<32x16xi32>
    %17 = arith.addi %6, %16 : vector<32x16xi32>
    %18 = arith.select %15, %17, %6 : vector<32x16xi1>, vector<32x16xi32>
    %c0_i32_4 = arith.constant 0 : i32
    %19 = vector.broadcast %c0_i32_4 : i32 to vector<32x16xi32>
    %20 = arith.cmpi sgt, %18, %19 : vector<32x16xi32>
    %c1_i32_5 = arith.constant 1 : i32
    %21 = tpu.dynamic_rotate %0 by %c1_i32_5 dim 0 : vector<32x16xf32>, i32 -> vector<32x16xf32>
    %cst = arith.constant 0.000000e+00 : f32
    %22 = vector.broadcast %cst : f32 to vector<32x16xf32>
    %23 = arith.select %20, %21, %22 : vector<32x16xi1>, vector<32x16xf32>
    %c15_i32 = arith.constant 15 : i32
    %24 = vector.broadcast %c15_i32 : i32 to vector<32x16xi32>
    %25 = arith.cmpi slt, %18, %24 : vector<32x16xi32>
    %c31_i32 = arith.constant 31 : i32
    %26 = tpu.dynamic_rotate %0 by %c31_i32 dim 0 : vector<32x16xf32>, i32 -> vector<32x16xf32>
    %cst_6 = arith.constant 0.000000e+00 : f32
    %27 = vector.broadcast %cst_6 : f32 to vector<32x16xf32>
    %28 = arith.select %25, %26, %27 : vector<32x16xi1>, vector<32x16xf32>
    %29 = arith.addf %23, %0 : vector<32x16xf32>
    %30 = arith.addf %29, %28 : vector<32x16xf32>
    %c0_i32_7 = arith.constant 0 : i32
    %31 = vector.broadcast %c0_i32_7 : i32 to vector<32x16xi32>
    %32 = arith.cmpi sgt, %2, %31 : vector<32x16xi32>
    %c1_i32_8 = arith.constant 1 : i32
    %33 = tpu.dynamic_rotate %30 by %c1_i32_8 dim 1 : vector<32x16xf32>, i32 -> vector<32x16xf32>
    %cst_9 = arith.constant 0.000000e+00 : f32
    %34 = vector.broadcast %cst_9 : f32 to vector<32x16xf32>
    %35 = arith.select %32, %33, %34 : vector<32x16xi1>, vector<32x16xf32>
    %c15_i32_10 = arith.constant 15 : i32
    %36 = vector.broadcast %c15_i32_10 : i32 to vector<32x16xi32>
    %37 = arith.cmpi slt, %2, %36 : vector<32x16xi32>
    %c15_i32_11 = arith.constant 15 : i32
    %38 = tpu.dynamic_rotate %30 by %c15_i32_11 dim 1 : vector<32x16xf32>, i32 -> vector<32x16xf32>
    %cst_12 = arith.constant 0.000000e+00 : f32
    %39 = vector.broadcast %cst_12 : f32 to vector<32x16xf32>
    %40 = arith.select %37, %38, %39 : vector<32x16xi1>, vector<32x16xf32>
    %41 = arith.addf %35, %30 : vector<32x16xf32>
    %42 = arith.addf %41, %40 : vector<32x16xf32>
    %cst_13 = arith.constant 1.125000e+00 : f32
    %43 = vector.broadcast %cst_13 : f32 to vector<32x16xf32>
    %44 = arith.mulf %0, %43 : vector<32x16xf32>
    %cst_14 = arith.constant 1.250000e-01 : f32
    %45 = vector.broadcast %cst_14 : f32 to vector<32x16xf32>
    %46 = arith.mulf %42, %45 : vector<32x16xf32>
    %47 = arith.subf %44, %46 : vector<32x16xf32>
    %c32_i32 = arith.constant 32 : i32
    %48 = arith.muli %arg0, %c32_i32 : i32
    %49 = vector.broadcast %48 : i32 to vector<32x16xi32>
    %50 = arith.addi %49, %1 : vector<32x16xi32>
    %c32_i32_15 = arith.constant 32 : i32
    %51 = vector.broadcast %c32_i32_15 : i32 to vector<32x16xi32>
    %52 = arith.cmpi slt, %50, %51 : vector<32x16xi32>
    %53 = math.absf %47 : vector<32x16xf32>
    %cst_16 = arith.constant 0.000000e+00 : f32
    %54 = vector.broadcast %cst_16 : f32 to vector<32x16xf32>
    %55 = arith.select %52, %53, %54 : vector<32x16xi1>, vector<32x16xf32>
    %cst_17 = arith.constant dense<0.000000e+00> : vector<16xf32>
    %56 = vector.multi_reduction <add>, %55, %cst_17 [0] : vector<32x16xf32> to vector<16xf32>
    %57 = vector.shape_cast %56 : vector<16xf32> to vector<1x16xf32>
    %c0_18 = arith.constant 0 : index
    %c0_19 = arith.constant 0 : index
    %58 = vector.load %arg2[%c0_18, %c0_19] : memref<1x16xf32, #tpu.memory_space<vmem>>, vector<1x16xf32>
    tpu.vector_store %arg2[%c0_18, %c0_19], %57 {strides = array<i32>} : memref<1x16xf32, #tpu.memory_space<vmem>>, vector<1x16xf32>,
    return
  }
  func.func @transform_0(%arg0: i32) -> (i32, i32) {
    %c0_i32 = arith.constant 0 : i32
    %c0_i32_0 = arith.constant 0 : i32
    return %arg0, %c0_i32 : i32, i32
  }
  func.func @transform_1(%arg0: i32) -> (i32, i32) {
    %c0_i32 = arith.constant 0 : i32
    %c0_i32_0 = arith.constant 0 : i32
    return %arg0, %c0_i32 : i32, i32
  }
}

</mosaic_0001>

<llo_original>
// kernel: tpu_custom_call.1
$region0: #{tpu_custom_call.1}
  #allocation0 [shape = 'u32[]', space=smem, size = 0x4, offset = 0x4, fixed_abs, tag = 'smem constant byte address 0x4 - core index']
  #allocation1 [shape = 'u32[144,128]{1,0:T(1,128)}', space=vmem, size = 0x12000, scoped, tag = 'internal scratch']
  %s0 = inlined_call_operand.vmem [shape: f32[32,16], index: 0, kind: input, shape index: {}]
  %s1 = inlined_call_operand.hbm [shape: f32[1,16], index: 1, kind: output, shape index: {}]
  %s2 = sld [smem:[#allocation0]]
  $region14: #{tpu_custom_call.1} parent=0
    _
  %s4 = ssub.s32 1, %s2
  %s5 = scalar_select 0, %s4, %s2
  $region1: #{tpu_custom_call.1} parent=0
    #allocation2 [shape = 'u8[512]{0}', space=vmem, size = 0x400, scoped, tag = 'output window, operand 0, single buffered']
    #allocation3 [shape = 's32[1]{0}', space=sflag, size = 0x4, scoped, tag = 'scoped memory for tpu_custom_call.1']
    %6 = vsyncpa [#allocation3], 0
    // Predicated region
    $region2: #{tpu_custom_call.1} parent=1 // pred_check
      _
    $region3: #{tpu_custom_call.1} parent=1 // pred_check_branch
      %8 = sbr.rel (0) target = $region5
    $region4: #{tpu_custom_call.1} parent=1 // pred_region
      _
    $region5: #{tpu_custom_call.1} parent=1 // pred_fallthru
      _
    %v9 = vld [vmem:[%s0] sm:$0xff]
    %v10 = vld [vmem:[%s0 + $0x8] sm:$0xff]
    %v11 = vld [vmem:[%s0 + $0x10] sm:$0xff]
    %v12 = vld [vmem:[%s0 + $0x18] sm:$0xff]
    %v13 = vlaneseq
    %v14 = vshrl.u32 %v13, 7
    %v15 = vadd.s32 %v14, 8
    %v16 = vadd.s32 %v14, 16
    %v17 = vadd.s32 %v14, 24
    %v18 = vlaneseq
    %v19 = vand.u32 %v18, 127
    %vm20 = vcmp.lt.s32.totalorder %v14, 0
    %v21 = vsub.s32 0, %v14
    %v22 = vsel %vm20, %v21, %v14
    %v23 = vshrl.u32 %v22, 4
    %v24 = vand.u32 %v22, 15
    %v25 = vsub.s32 0, %v24
    %v26 = vsel %vm20, %v25, %v24
    %vm27 = vcmp.lt.s32.totalorder %v15, 0
    %v28 = vsub.s32 0, %v15
    %v29 = vsel %vm27, %v28, %v15
    %v30 = vshrl.u32 %v29, 4
    %v31 = vand.u32 %v29, 15
    %v32 = vsub.s32 0, %v31
    %v33 = vsel %vm27, %v32, %v31
    %vm34 = vcmp.lt.s32.totalorder %v16, 0
    %v35 = vsub.s32 0, %v16
    %v36 = vsel %vm34, %v35, %v16
    %v37 = vshrl.u32 %v36, 4
    %v38 = vand.u32 %v36, 15
    %v39 = vsub.s32 0, %v38
    %v40 = vsel %vm34, %v39, %v38
    %vm41 = vcmp.lt.s32.totalorder %v17, 0
    %v42 = vsub.s32 0, %v17
    %v43 = vsel %vm41, %v42, %v17
    %v44 = vshrl.u32 %v43, 4
    %v45 = vand.u32 %v43, 15
    %v46 = vsub.s32 0, %v45
    %v47 = vsel %vm41, %v46, %v45
    %vm48 = vcmp.ne.s32.totalorder %v26, 0
    %vm49 = vcmp.ne.s32.totalorder %v33, 0
    %vm50 = vcmp.ne.s32.totalorder %v40, 0
    %vm51 = vcmp.ne.s32.totalorder %v47, 0
    %vm52 = vcmp.lt.s32.totalorder %v26, 0
    %vm53 = vcmp.lt.s32.totalorder %v33, 0
    %vm54 = vcmp.lt.s32.totalorder %v40, 0
    %vm55 = vcmp.lt.s32.totalorder %v47, 0
    %vm56 = vmand %vm52, %vm48
    %vm57 = vmand %vm53, %vm49
    %vm58 = vmand %vm54, %vm50
    %vm59 = vmand %vm55, %vm51
    %v60 = vadd.s32 %v26, 16
    %v61 = vadd.s32 %v33, 16
    %v62 = vadd.s32 %v40, 16
    %v63 = vadd.s32 %v47, 16
    %v64 = vsel %vm56, %v60, %v26
    %v65 = vsel %vm57, %v61, %v33
    %v66 = vsel %vm58, %v62, %v40
    %v67 = vsel %vm59, %v63, %v47
    %vm68 = vcmp.gt.s32.totalorder %v64, 0
    %vm69 = vcmp.gt.s32.totalorder %v65, 0
    %vm70 = vcmp.gt.s32.totalorder %v66, 0
    %vm71 = vcmp.gt.s32.totalorder %v67, 0
    %v72 = vrot.slane %v9, 7
    %v73 = vrot.slane %v10, 7
    %v74 = vrot.slane %v11, 7
    %v75 = vrot.slane %v12, 7
    %vm76 = vcmp.lt.s32.totalorder %v14, 1
    %v77 = vsel %vm76, %v74, %v75
    %v78 = vsel %vm76, %v73, %v74
    %v79 = vsel %vm76, %v72, %v73
    %v80 = vsel %vm76, %v75, %v72
    %v81 = vsel %vm68, %v80, 0.0
    %v82 = vsel %vm69, %v79, 0.0
    %v83 = vsel %vm70, %v78, 0.0
    %v84 = vsel %vm71, %v77, 0.0
    %vm85 = vcmp.lt.s32.totalorder %v64, 15
    %vm86 = vcmp.lt.s32.totalorder %v65, 15
    %vm87 = vcmp.lt.s32.totalorder %v66, 15
    %vm88 = vcmp.lt.s32.totalorder %v67, 15
    %v89 = vrot.slane %v9, 1
    %v90 = vrot.slane %v10, 1
    %v91 = vrot.slane %v11, 1
    %v92 = vrot.slane %v12, 1
    %vm93 = vcmp.lt.s32.totalorder %v14, 7
    %v94 = vsel %vm93, %v91, %v92
    %v95 = vsel %vm93, %v90, %v91
    %v96 = vsel %vm93, %v89, %v90
    %v97 = vsel %vm93, %v92, %v89
    %v98 = vsel %vm85, %v96, 0.0
    %v99 = vsel %vm86, %v95, 0.0
    %v100 = vsel %vm87, %v94, 0.0
    %v101 = vsel %vm88, %v97, 0.0
    %v102 = vadd.f32 %v81, %v9
    %v103 = vadd.f32 %v82, %v10
    %v104 = vadd.f32 %v83, %v11
    %v105 = vadd.f32 %v84, %v12
    %v106 = vadd.f32 %v102, %v98
    %v107 = vadd.f32 %v103, %v99
    %v108 = vadd.f32 %v104, %v100
    %v109 = vadd.f32 %v105, %v101
    %vm110 = vcmp.gt.s32.totalorder %v19, 0
    %vm111 = vcmask 1047680
    %112 = vrot.lane.b32.xlu0 %v106, 16
    %v113 = vpop.permute.xlu0 %112
    %v114 = vsel %vm111, %v113, %v106
    %115 = vrot.lane.b32.xlu0 %v107, 16
    %v116 = vpop.permute.xlu0 %115
    %v117 = vsel %vm111, %v116, %v107
    %118 = vrot.lane.b32.xlu0 %v108, 16
    %v119 = vpop.permute.xlu0 %118
    %v120 = vsel %vm111, %v119, %v108
    %121 = vrot.lane.b32.xlu0 %v109, 16
    %v122 = vpop.permute.xlu0 %121
    %v123 = vsel %vm111, %v122, %v109
    %124 = vrot.lane.b32.xlu0 %v114, 16
    %v125 = vpop.permute.xlu0 %124
    %126 = vrot.lane.b32.xlu0 %v117, 16
    %v127 = vpop.permute.xlu0 %126
    %128 = vrot.lane.b32.xlu0 %v120, 16
    %v129 = vpop.permute.xlu0 %128
    %130 = vrot.lane.b32.xlu0 %v123, 16
    %v131 = vpop.permute.xlu0 %130
    %v132 = vsel %vm111, %v125, %v106
    %v133 = vsel %vm111, %v127, %v107
    %v134 = vsel %vm111, %v129, %v108
    %v135 = vsel %vm111, %v131, %v109
    %140 = vrot.lane.b32.xlu0 %v132, 113
    %v141 = vpop.permute.xlu0 %140
    %142 = vrot.lane.b32.xlu0 %v133, 113
    %v143 = vpop.permute.xlu0 %142
    %144 = vrot.lane.b32.xlu0 %v134, 113
    %v145 = vpop.permute.xlu0 %144
    %146 = vrot.lane.b32.xlu0 %v135, 113
    %v147 = vpop.permute.xlu0 %146
    %v152 = vsel %vm110, %v141, 0.0
    %v153 = vsel %vm110, %v143, 0.0
    %v154 = vsel %vm110, %v145, 0.0
    %v155 = vsel %vm110, %v147, 0.0
    %vm156 = vcmp.lt.s32.totalorder %v19, 15
    %157 = vrot.lane.b32.xlu0 %v132, 127
    %v158 = vpop.permute.xlu0 %157
    %159 = vrot.lane.b32.xlu0 %v133, 127
    %v160 = vpop.permute.xlu0 %159
    %161 = vrot.lane.b32.xlu0 %v134, 127
    %v162 = vpop.permute.xlu0 %161
    %163 = vrot.lane.b32.xlu0 %v135, 127
    %v164 = vpop.permute.xlu0 %163
    %v169 = vsel %vm156, %v158, 0.0
    %v170 = vsel %vm156, %v160, 0.0
    %v171 = vsel %vm156, %v162, 0.0
    %v172 = vsel %vm156, %v164, 0.0
    %v173 = vadd.f32 %v152, %v106
    %v174 = vadd.f32 %v153, %v107
    %v175 = vadd.f32 %v154, %v108
    %v176 = vadd.f32 %v155, %v109
    %v177 = vadd.f32 %v173, %v169
    %v178 = vadd.f32 %v174, %v170
    %v179 = vadd.f32 %v175, %v171
    %v180 = vadd.f32 %v176, %v172
    %v181 = vmul.f32 %v9, 1.125
    %v182 = vmul.f32 %v10, 1.125
    %v183 = vmul.f32 %v11, 1.125
    %v184 = vmul.f32 %v12, 1.125
    %v185 = vmul.f32 %v177, 0.125
    %v186 = vmul.f32 %v178, 0.125
    %v187 = vmul.f32 %v179, 0.125
    %v188 = vmul.f32 %v180, 0.125
    %v189 = vsub.f32 %v181, %v185
    %v190 = vsub.f32 %v182, %v186
    %v191 = vsub.f32 %v183, %v187
    %v192 = vsub.f32 %v184, %v188
    %s193 = smul.u32 0, 32
    %v194 = vstv %s193
    %v195 = vadd.s32 %v194, %v14
    %v196 = vadd.s32 %v194, %v15
    %v197 = vadd.s32 %v194, %v16
    %v198 = vadd.s32 %v194, %v17
    %vm199 = vcmp.lt.s32.totalorder %v195, 32
    %vm200 = vcmp.lt.s32.totalorder %v196, 32
    %vm201 = vcmp.lt.s32.totalorder %v197, 32
    %vm202 = vcmp.lt.s32.totalorder %v198, 32
    %v203 = vand.u32 2147483647, %v189
    %v204 = vand.u32 2147483647, %v190
    %v205 = vand.u32 2147483647, %v191
    %v206 = vand.u32 2147483647, %v192
    %v207 = vsel %vm199, %v203, 0.0
    %v208 = vsel %vm200, %v204, 0.0
    %v209 = vsel %vm201, %v205, 0.0
    %v210 = vsel %vm202, %v206, 0.0
    %vm211 = vcmask 130048
    %v212 = vsel %vm211, %v207, 0.0
    %v213 = vsel %vm211, %v208, 0.0
    %v214 = vadd.f32 %v212, %v213
    %v215 = vsel %vm211, %v209, 0.0
    %v216 = vadd.f32 %v214, %v215
    %v217 = vsel %vm211, %v210, 0.0
    %v218 = vadd.f32 %v216, %v217
    %v219 = vrot.slane %v218, 4
    %v220 = vadd.f32 %v218, %v219
    %v221 = vrot.slane %v220, 2
    %v222 = vadd.f32 %v220, %v221
    %v223 = vrot.slane %v222, 1
    %v224 = vadd.f32 %v222, %v223
    %vm225 = vcmask 122880
    %226 = vst.msk [vmem:[#allocation2] sm:$0x1] %vm225, %v224
    // Predicated region
    $region6: #{tpu_custom_call.1} parent=1 // pred_check
      _
    $region7: #{tpu_custom_call.1} parent=1 // pred_check_branch
      %228 = sbr.rel (0) target = $region9
    $region8: #{tpu_custom_call.1} parent=1 // pred_region
      %s230 = ssub.s32 16, 16
      %231 = vsyncadd [#allocation3], %s230
      %s233 = sshll.u32 [#allocation2], 4
      %s234 = int_to_ptr.vmem [resolvable:$true] %s233
      %236 = dma.vmem_to_hbm [thread:$0]  %s234, 16, %s1, [#allocation3]
    $region9: #{tpu_custom_call.1} parent=1 // pred_fallthru
      _
    // Predicated region
    $region10: #{tpu_custom_call.1} parent=1 // pred_check
      _
    $region11: #{tpu_custom_call.1} parent=1 // pred_check_branch
      %238 = sbr.rel (0) target = $region13
    $region12: #{tpu_custom_call.1} parent=1 // pred_region
      %239 = dma.done [#allocation3], 16
    $region13: #{tpu_custom_call.1} parent=1 // pred_fallthru
      _
    %240 = vsyncpa [#allocation3], 1

</llo_original>
